<compile_context>
chip_gen: v5e
topology: v5e:2x2
jax: 0.10.0
libtpu: 0.0.40
codegen_flags: <defaults>
</compile_context>

<pallas_src>
import jax
import jax.numpy as jnp
from jax.experimental import pallas as pl
from jax.experimental.pallas import tpu as pltpu

HIDDEN = 32          # hidden_size
MLP_DIM = 64         # mlp_dim (attention branch only -> unused, dead code)
BOTTLENECK = 32      # bottleneck_dim
PRE_POOL_MID = 512   # fixed 512 in mlp_pre_pool_dims
EPS = 1e-5           # BatchNorm1d eps
TILE_N = 256         # rows per grid step (multiple of 8)


def _round_up(x, m):
    return (x + m - 1) // m * m


# --------------------------------------------------------------------------
# Kernel 1: spatial embedding (VPU outer product) + mlp_pre_pool Linear1
#           (0.05 folded into weights) + masked BN1 partial statistics.
# --------------------------------------------------------------------------
def _embed_p1_kernel(add_ref, hid_ref, mask_ref, wse_ref, bse_ref,
                     wp1p_ref, wp1h_ref, bp1_ref, p1_ref, st_ref):
    f32 = jnp.float32
    add = add_ref[...]                       # (T, 4) f32: [px, py, vx, vy]
    wse = wse_ref[...]                       # (2, H) f32
    # K=2 contraction as broadcast-multiply-add (avoids an MXU push/pop)
    pos_emb = (add[:, 0:1] * wse[0:1, :] + add[:, 1:2] * wse[1:2, :]
               + bse_ref[...])               # (T, H) f32
    # p1_pre = 0.05 * cat([pos_emb, hidden]) @ W_p1 + b_p1  (scale folded in W)
    p1 = (jnp.dot(pos_emb.astype(jnp.bfloat16), wp1p_ref[...],
                  preferred_element_type=f32)
          + jnp.dot(hid_ref[...], wp1h_ref[...], preferred_element_type=f32)
          + bp1_ref[...])                    # (T, 512) f32
    p1_ref[...] = p1
    # single-pass, padding-masked BN statistics for this tile
    pm = p1 * mask_ref[...]
    st_ref[...] = jnp.zeros((8, PRE_POOL_MID), f32)
    st_ref[0:1, :] = jnp.sum(pm, axis=0, keepdims=True)        # sum
    st_ref[1:2, :] = jnp.sum(pm * p1, axis=0, keepdims=True)   # sum of squares


# --------------------------------------------------------------------------
# Kernel 2: BN1 (as per-feature affine from global stats) + ReLU +
#           mlp_pre_pool Linear2 + masked BN2 partial statistics.
# --------------------------------------------------------------------------
def _bn1_p2_kernel(p1_ref, mask_ref, sc1_ref, sh1_ref, wp2_ref, bp2_ref,
                   p2_ref, st_ref):
    f32 = jnp.float32
    y1 = jnp.maximum(p1_ref[...] * sc1_ref[...] + sh1_ref[...], 0.0)  # BN+ReLU
    p2 = (jnp.dot(y1.astype(jnp.bfloat16), wp2_ref[...],
                  preferred_element_type=f32) + bp2_ref[...])         # (T, 32)
    p2_ref[...] = p2
    pm = p2 * mask_ref[...]
    st_ref[...] = jnp.zeros((8, BOTTLENECK), f32)
    st_ref[0:1, :] = jnp.sum(pm, axis=0, keepdims=True)
    st_ref[1:2, :] = jnp.sum(pm * p2, axis=0, keepdims=True)


# --------------------------------------------------------------------------
# Kernel 3: BN2 + ReLU on a lane-dense packed view (4 rows of width 32 per
#           128-lane vreg row) -> unmasked vector stores.
# --------------------------------------------------------------------------
def _bn2_relu_kernel(p2_ref, sc_ref, sh_ref, out_ref):
    out_ref[...] = jnp.maximum(p2_ref[...] * sc_ref[...] + sh_ref[...], 0.0)


def _affine_from_stats(s, ss, n, gamma, beta):
    """Turn (sum, sum_sq, count) into the BN scale/shift affine (training mode,
    biased variance). var clamped at 0 for the E[x^2]-mu^2 form."""
    mu = s / n
    var = jnp.maximum(ss / n - mu * mu, 0.0)
    inv = jax.lax.rsqrt(var + EPS)
    scale = gamma * inv
    shift = beta - mu * scale
    return scale, shift


@jax.jit
def atten_pool_forward(hidden, additional, kparams):
    """hidden: (N, HIDDEN); additional: (..., 4) with prod(leading dims) == N."""
    (w_se, b_se, wp1_pos, wp1_hid, b_p1, g_p1, be_p1,
     w_p2, b_p2, g_p2, be_p2) = kparams

    add_flat = additional.reshape(-1, 4).astype(jnp.float32)
    n = add_flat.shape[0]
    hid = hidden.astype(jnp.bfloat16)        # matmul-only operand -> bf16 DMA

    tile = min(TILE_N, _round_up(n, 8))
    n_pad = _round_up(n, tile)
    nt = n_pad // tile
    if n_pad != n:
        add_flat = jnp.pad(add_flat, ((0, n_pad - n), (0, 0)))
        hid = jnp.pad(hid, ((0, n_pad - n), (0, 0)))
    # rows >= n are padding: masked out of all BN statistics
    mask = (jnp.arange(n_pad, dtype=jnp.int32) < n).astype(jnp.float32)[:, None]

    par = pltpu.CompilerParams(dimension_semantics=("parallel",))
    row = lambda i: (i, 0)
    fixed = lambda i: (0, 0)

    # ---- pass 1: embeddings + Linear1 + BN1 partial stats --------------------
    p1_pre, st1 = pl.pallas_call(
        _embed_p1_kernel,
        grid=(nt,),
        in_specs=[
            pl.BlockSpec((tile, 4), row),                      # additional
            pl.BlockSpec((tile, HIDDEN), row),                 # hidden (bf16)
            pl.BlockSpec((tile, 1), row),                      # valid-row mask
            pl.BlockSpec((2, HIDDEN), fixed),                  # w_se
            pl.BlockSpec((1, HIDDEN), fixed),                  # b_se
            pl.BlockSpec((HIDDEN, PRE_POOL_MID), fixed),       # 0.05*W_p1[:H] bf16
            pl.BlockSpec((HIDDEN, PRE_POOL_MID), fixed),       # 0.05*W_p1[H:] bf16
            pl.BlockSpec((1, PRE_POOL_MID), fixed),            # b_p1
        ],
        out_specs=(
            pl.BlockSpec((tile, PRE_POOL_MID), row),           # p1_pre
            pl.BlockSpec((8, PRE_POOL_MID), row),              # per-tile stats
        ),
        out_shape=(
            jax.ShapeDtypeStruct((n_pad, PRE_POOL_MID), jnp.float32),
            jax.ShapeDtypeStruct((nt * 8, PRE_POOL_MID), jnp.float32),
        ),
        compiler_params=par,
        cost_estimate=pl.CostEstimate(
            flops=2 * n_pad * 2 * HIDDEN * PRE_POOL_MID,
            transcendentals=0,
            bytes_accessed=(n_pad * (16 + 2 * HIDDEN + 4 + 4 * PRE_POOL_MID)
                            + 2 * 2 * HIDDEN * PRE_POOL_MID
                            + nt * 8 * 4 * PRE_POOL_MID)),
    )(add_flat, hid, mask, w_se, b_se, wp1_pos, wp1_hid, b_p1)

    st1 = st1.reshape(nt, 8, PRE_POOL_MID)
    sc1, sh1 = _affine_from_stats(
        jnp.sum(st1[:, 0, :], axis=0, keepdims=True),
        jnp.sum(st1[:, 1, :], axis=0, keepdims=True), n, g_p1, be_p1)

    # ---- pass 2: BN1+ReLU + Linear2 + BN2 partial stats -----------------------
    p2_pre, st2 = pl.pallas_call(
        _bn1_p2_kernel,
        grid=(nt,),
        in_specs=[
            pl.BlockSpec((tile, PRE_POOL_MID), row),           # p1_pre
            pl.BlockSpec((tile, 1), row),                      # mask
            pl.BlockSpec((1, PRE_POOL_MID), fixed),            # BN1 scale
            pl.BlockSpec((1, PRE_POOL_MID), fixed),            # BN1 shift
            pl.BlockSpec((PRE_POOL_MID, BOTTLENECK), fixed),   # W_p2 bf16
            pl.BlockSpec((1, BOTTLENECK), fixed),              # b_p2
        ],
        out_specs=(
            pl.BlockSpec((tile, BOTTLENECK), row),             # p2_pre
            pl.BlockSpec((8, BOTTLENECK), row),                # per-tile stats
        ),
        out_shape=(
            jax.ShapeDtypeStruct((n_pad, BOTTLENECK), jnp.float32),
            jax.ShapeDtypeStruct((nt * 8, BOTTLENECK), jnp.float32),
        ),
        compiler_params=par,
        cost_estimate=pl.CostEstimate(
            flops=2 * n_pad * PRE_POOL_MID * BOTTLENECK,
            transcendentals=0,
            bytes_accessed=(n_pad * (4 * PRE_POOL_MID + 4 + 4 * BOTTLENECK)
                            + 2 * PRE_POOL_MID * BOTTLENECK
                            + nt * 8 * 4 * BOTTLENECK)),
    )(p1_pre, mask, sc1, sh1, w_p2, b_p2)

    st2 = st2.reshape(nt, 8, BOTTLENECK)
    sc2, sh2 = _affine_from_stats(
        jnp.sum(st2[:, 0, :], axis=0, keepdims=True),
        jnp.sum(st2[:, 1, :], axis=0, keepdims=True), n, g_p2, be_p2)

    # ---- pass 3: BN2 + ReLU on a lane-dense (N/4, 128) packing ----------------
    lanes = 4 * BOTTLENECK                       # 128
    p2_v = p2_pre.reshape(n_pad // 4, lanes)     # row-major repack, 4 rows/vreg row
    sc2_v = jnp.tile(sc2, (1, 4))
    sh2_v = jnp.tile(sh2, (1, 4))
    out_v = pl.pallas_call(
        _bn2_relu_kernel,
        grid=(nt,),
        in_specs=[
            pl.BlockSpec((tile // 4, lanes), row),
            pl.BlockSpec((1, lanes), fixed),
            pl.BlockSpec((1, lanes), fixed),
        ],
        out_specs=pl.BlockSpec((tile // 4, lanes), row),
        out_shape=jax.ShapeDtypeStruct((n_pad // 4, lanes), jnp.float32),
        compiler_params=par,
    )(p2_v, sc2_v, sh2_v)

    return out_v.reshape(n_pad, BOTTLENECK)[:n]


# --------------------------------------------------------------------------
# Parameters
# --------------------------------------------------------------------------
def init_params(key):
    """PyTorch-style init of all AttenPoolNet parameters (Linear uniform bounds,
    BatchNorm gamma=1 / beta=0). Attention-branch params are created for module
    fidelity but never influence the forward output."""
    ks = jax.random.split(key, 6)

    def lin(k, din, dout):
        kw, kb = jax.random.split(k)
        bound = 1.0 / (din ** 0.5)
        w = jax.random.uniform(kw, (din, dout), jnp.float32, -bound, bound)
        b = jax.random.uniform(kb, (1, dout), jnp.float32, -bound, bound)
        return w, b

    ones = lambda d: jnp.ones((1, d), jnp.float32)
    zeros = lambda d: jnp.zeros((1, d), jnp.float32)

    w_se, b_se = lin(ks[0], 2, HIDDEN)                  # spatial_embedding
    w_ve, b_ve = lin(ks[1], 2, HIDDEN)                  # velocity_embedding (dead)
    w_a1, b_a1 = lin(ks[2], 2 * HIDDEN, MLP_DIM)        # attention_mlp (dead)
    w_a2, b_a2 = lin(ks[3], MLP_DIM, 1)                 # attention_mlp (dead)
    w_p1, b_p1 = lin(ks[4], 2 * HIDDEN, PRE_POOL_MID)   # mlp_pre_pool Linear1
    w_p2, b_p2 = lin(ks[5], PRE_POOL_MID, BOTTLENECK)   # mlp_pre_pool Linear2

    return dict(
        w_se=w_se, b_se=b_se, w_ve=w_ve, b_ve=b_ve,
        w_a1=w_a1, b_a1=b_a1, g_a1=ones(MLP_DIM), be_a1=zeros(MLP_DIM),
        w_a2=w_a2, b_a2=b_a2, g_a2=ones(1), be_a2=zeros(1),
        w_p1=w_p1, b_p1=b_p1, g_p1=ones(PRE_POOL_MID), be_p1=zeros(PRE_POOL_MID),
        w_p2=w_p2, b_p2=b_p2, g_p2=ones(BOTTLENECK), be_p2=zeros(BOTTLENECK),
    )


def prepare_params(p):
    """One-time kernel-side prep:
    - drop the dead attention / velocity-embedding branch (softmax over a size-1
      axis is identically 1.0 -> bit-exact),
    - fold the 0.05 scale into W_p1 and pre-split it into pos_emb / hidden halves,
    - pre-cast the MXU weights to bf16 (f32 accumulation in the kernels)."""
    w_p1s = (0.05 * p["w_p1"]).astype(jnp.bfloat16)
    return (p["w_se"], p["b_se"],
            w_p1s[:HIDDEN], w_p1s[HIDDEN:], p["b_p1"], p["g_p1"], p["be_p1"],
            p["w_p2"].astype(jnp.bfloat16), p["b_p2"], p["g_p2"], p["be_p2"])


if __name__ == "__main__":
    key = jax.random.PRNGKey(0)
    k_add, k_hid, k_par = jax.random.split(key, 3)

    params = init_params(k_par)
    kparams = prepare_params(params)

    additional = jax.random.normal(k_add, (2, 8, 4), jnp.float32)  # (..., 4) = pos|vel
    n_rows = 2 * 8
    hidden = jax.random.normal(k_hid, (n_rows, HIDDEN), jnp.float32)

    out = atten_pool_forward(hidden, additional, kparams)
    jax.block_until_ready(out)
    assert out.shape == (n_rows, BOTTLENECK) and out.dtype == jnp.float32
    print("KERNEL_OK")
</pallas_src>

<mosaic_0001>
module attributes {stable_mosaic.version = 11 : i64} {
  func.func @_embed_p1_kernel(%arg0: i32, %arg1: memref<16x4xf32, #tpu.memory_space<vmem>>, %arg2: memref<16x32xbf16, #tpu.memory_space<vmem>>, %arg3: memref<16x1xf32, #tpu.memory_space<vmem>>, %arg4: memref<2x32xf32, #tpu.memory_space<vmem>>, %arg5: memref<1x32xf32, #tpu.memory_space<vmem>>, %arg6: memref<32x512xbf16, #tpu.memory_space<vmem>>, %arg7: memref<32x512xbf16, #tpu.memory_space<vmem>>, %arg8: memref<1x512xf32, #tpu.memory_space<vmem>>, %arg9: memref<16x512xf32, #tpu.memory_space<vmem>>, %arg10: memref<8x512xf32, #tpu.memory_space<vmem>>) attributes {dimension_semantics = [#tpu.dimension_semantics<parallel>], iteration_bounds = array<i64: 1>, scalar_prefetch = 0 : i64, scratch_operands = 0 : i64, tpu.core_type = #tpu.core_type<tc>, window_params = [{transform_indices = @transform_0, window_bounds = array<i64: 16, 4>}, {transform_indices = @transform_1, window_bounds = array<i64: 16, 32>}, {transform_indices = @transform_2, window_bounds = array<i64: 16, 1>}, {pipeline_mode = #tpu.pipeline_mode<synchronous>, transform_indices = @transform_3, window_bounds = array<i64: 2, 32>}, {pipeline_mode = #tpu.pipeline_mode<synchronous>, transform_indices = @transform_4, window_bounds = array<i64: 1, 32>}, {pipeline_mode = #tpu.pipeline_mode<synchronous>, transform_indices = @transform_5, window_bounds = array<i64: 32, 512>}, {pipeline_mode = #tpu.pipeline_mode<synchronous>, transform_indices = @transform_6, window_bounds = array<i64: 32, 512>}, {pipeline_mode = #tpu.pipeline_mode<synchronous>, transform_indices = @transform_7, window_bounds = array<i64: 1, 512>}, {transform_indices = @transform_8, window_bounds = array<i64: 16, 512>}, {transform_indices = @transform_9, window_bounds = array<i64: 8, 512>}]} {
    %c0 = arith.constant 0 : index
    %c0_0 = arith.constant 0 : index
    %0 = vector.load %arg1[%c0, %c0_0] : memref<16x4xf32, #tpu.memory_space<vmem>>, vector<16x4xf32>
    %c0_1 = arith.constant 0 : index
    %c0_2 = arith.constant 0 : index
    %1 = vector.load %arg4[%c0_1, %c0_2] : memref<2x32xf32, #tpu.memory_space<vmem>>, vector<2x32xf32>
    %2 = vector.extract_strided_slice %0 {offsets = [0, 0], sizes = [16, 1], strides = [1, 1]} : vector<16x4xf32> to vector<16x1xf32>
    %3 = vector.extract_strided_slice %1 {offsets = [0, 0], sizes = [1, 32], strides = [1, 1]} : vector<2x32xf32> to vector<1x32xf32>
    %4 = vector.broadcast %2 : vector<16x1xf32> to vector<16x32xf32>
    %5 = vector.broadcast %3 : vector<1x32xf32> to vector<16x32xf32>
    %6 = arith.mulf %4, %5 : vector<16x32xf32>
    %7 = vector.extract_strided_slice %0 {offsets = [0, 1], sizes = [16, 1], strides = [1, 1]} : vector<16x4xf32> to vector<16x1xf32>
    %8 = vector.extract_strided_slice %1 {offsets = [1, 0], sizes = [1, 32], strides = [1, 1]} : vector<2x32xf32> to vector<1x32xf32>
    %9 = vector.broadcast %7 : vector<16x1xf32> to vector<16x32xf32>
    %10 = vector.broadcast %8 : vector<1x32xf32> to vector<16x32xf32>
    %11 = arith.mulf %9, %10 : vector<16x32xf32>
    %12 = arith.addf %6, %11 : vector<16x32xf32>
    %c0_3 = arith.constant 0 : index
    %c0_4 = arith.constant 0 : index
    %13 = vector.load %arg5[%c0_3, %c0_4] : memref<1x32xf32, #tpu.memory_space<vmem>>, vector<1x32xf32>
    %14 = vector.broadcast %13 : vector<1x32xf32> to vector<16x32xf32>
    %15 = arith.addf %12, %14 : vector<16x32xf32>
    %16 = arith.truncf %15 : vector<16x32xf32> to vector<16x32xbf16>
    %c0_5 = arith.constant 0 : index
    %c0_6 = arith.constant 0 : index
    %17 = vector.load %arg6[%c0_5, %c0_6] : memref<32x512xbf16, #tpu.memory_space<vmem>>, vector<32x512xbf16>
    %cst = arith.constant dense<0.000000e+00> : vector<16x512xf32>
    %18 = tpu.matmul %16, %17, %cst {dimension_numbers = #tpu.dot_dimension_numbers<[1], [0], [0], [1], [0, 0, 1, 1], [], []>} : vector<16x32xbf16>, vector<32x512xbf16>, vector<16x512xf32> -> vector<16x512xf32>
    %c0_7 = arith.constant 0 : index
    %c0_8 = arith.constant 0 : index
    %19 = vector.load %arg2[%c0_7, %c0_8] : memref<16x32xbf16, #tpu.memory_space<vmem>>, vector<16x32xbf16>
    %c0_9 = arith.constant 0 : index
    %c0_10 = arith.constant 0 : index
    %20 = vector.load %arg7[%c0_9, %c0_10] : memref<32x512xbf16, #tpu.memory_space<vmem>>, vector<32x512xbf16>
    %cst_11 = arith.constant dense<0.000000e+00> : vector<16x512xf32>
    %21 = tpu.matmul %19, %20, %cst_11 {dimension_numbers = #tpu.dot_dimension_numbers<[1], [0], [0], [1], [0, 0, 1, 1], [], []>} : vector<16x32xbf16>, vector<32x512xbf16>, vector<16x512xf32> -> vector<16x512xf32>
    %22 = arith.addf %18, %21 : vector<16x512xf32>
    %c0_12 = arith.constant 0 : index
    %c0_13 = arith.constant 0 : index
    %23 = vector.load %arg8[%c0_12, %c0_13] : memref<1x512xf32, #tpu.memory_space<vmem>>, vector<1x512xf32>
    %24 = vector.broadcast %23 : vector<1x512xf32> to vector<16x512xf32>
    %25 = arith.addf %22, %24 : vector<16x512xf32>
    %c0_14 = arith.constant 0 : index
    %c0_15 = arith.constant 0 : index
    %26 = vector.load %arg9[%c0_14, %c0_15] : memref<16x512xf32, #tpu.memory_space<vmem>>, vector<16x512xf32>
    tpu.vector_store %arg9[%c0_14, %c0_15], %25 {strides = array<i32>} : memref<16x512xf32, #tpu.memory_space<vmem>>, vector<16x512xf32>,
    %c0_16 = arith.constant 0 : index
    %c0_17 = arith.constant 0 : index
    %27 = vector.load %arg3[%c0_16, %c0_17] : memref<16x1xf32, #tpu.memory_space<vmem>>, vector<16x1xf32>
    %28 = vector.broadcast %27 : vector<16x1xf32> to vector<16x512xf32>
    %29 = arith.mulf %25, %28 : vector<16x512xf32>
    %cst_18 = arith.constant 0.000000e+00 : f32
    %30 = vector.broadcast %cst_18 : f32 to vector<8x512xf32>
    %c0_19 = arith.constant 0 : index
    %c0_20 = arith.constant 0 : index
    %31 = vector.load %arg10[%c0_19, %c0_20] : memref<8x512xf32, #tpu.memory_space<vmem>>, vector<8x512xf32>
    tpu.vector_store %arg10[%c0_19, %c0_20], %30 {strides = array<i32>} : memref<8x512xf32, #tpu.memory_space<vmem>>, vector<8x512xf32>,
    %cst_21 = arith.constant dense<0.000000e+00> : vector<512xf32>
    %32 = vector.multi_reduction <add>, %29, %cst_21 [0] : vector<16x512xf32> to vector<512xf32>
    %33 = vector.shape_cast %32 : vector<512xf32> to vector<1x512xf32>
    %c0_22 = arith.constant 0 : index
    %c0_23 = arith.constant 0 : index
    %34 = vector.load %arg10[%c0_22, %c0_23] : memref<8x512xf32, #tpu.memory_space<vmem>>, vector<1x512xf32>
    tpu.vector_store %arg10[%c0_22, %c0_23], %33 {strides = array<i32>} : memref<8x512xf32, #tpu.memory_space<vmem>>, vector<1x512xf32>,
    %35 = arith.mulf %29, %25 : vector<16x512xf32>
    %cst_24 = arith.constant dense<0.000000e+00> : vector<512xf32>
    %36 = vector.multi_reduction <add>, %35, %cst_24 [0] : vector<16x512xf32> to vector<512xf32>
    %37 = vector.shape_cast %36 : vector<512xf32> to vector<1x512xf32>
    %c1 = arith.constant 1 : index
    %c0_25 = arith.constant 0 : index
    %38 = vector.load %arg10[%c1, %c0_25] : memref<8x512xf32, #tpu.memory_space<vmem>>, vector<1x512xf32>
    tpu.vector_store %arg10[%c1, %c0_25], %37 {strides = array<i32>} : memref<8x512xf32, #tpu.memory_space<vmem>>, vector<1x512xf32>,
    return
  }
  func.func @transform_0(%arg0: i32) -> (i32, i32) {
    %c0_i32 = arith.constant 0 : i32
    %c0_i32_0 = arith.constant 0 : i32
    return %arg0, %c0_i32 : i32, i32
  }
  func.func @transform_1(%arg0: i32) -> (i32, i32) {
    %c0_i32 = arith.constant 0 : i32
    %c0_i32_0 = arith.constant 0 : i32
    return %arg0, %c0_i32 : i32, i32
  }
  func.func @transform_2(%arg0: i32) -> (i32, i32) {
    %c0_i32 = arith.constant 0 : i32
    %c0_i32_0 = arith.constant 0 : i32
    return %arg0, %c0_i32 : i32, i32
  }
  func.func @transform_3(%arg0: i32) -> (i32, i32) {
    %c0_i32 = arith.constant 0 : i32
    %c0_i32_0 = arith.constant 0 : i32
    %c0_i32_1 = arith.constant 0 : i32
    return %c0_i32, %c0_i32_0 : i32, i32
  }
  func.func @transform_4(%arg0: i32) -> (i32, i32) {
    %c0_i32 = arith.constant 0 : i32
    %c0_i32_0 = arith.constant 0 : i32
    %c0_i32_1 = arith.constant 0 : i32
    return %c0_i32, %c0_i32_0 : i32, i32
  }
  func.func @transform_5(%arg0: i32) -> (i32, i32) {
    %c0_i32 = arith.constant 0 : i32
    %c0_i32_0 = arith.constant 0 : i32
    %c0_i32_1 = arith.constant 0 : i32
    return %c0_i32, %c0_i32_0 : i32, i32
  }
  func.func @transform_6(%arg0: i32) -> (i32, i32) {
    %c0_i32 = arith.constant 0 : i32
    %c0_i32_0 = arith.constant 0 : i32
    %c0_i32_1 = arith.constant 0 : i32
    return %c0_i32, %c0_i32_0 : i32, i32
  }
  func.func @transform_7(%arg0: i32) -> (i32, i32) {
    %c0_i32 = arith.constant 0 : i32
    %c0_i32_0 = arith.constant 0 : i32
    %c0_i32_1 = arith.constant 0 : i32
    return %c0_i32, %c0_i32_0 : i32, i32
  }
  func.func @transform_8(%arg0: i32) -> (i32, i32) {
    %c0_i32 = arith.constant 0 : i32
    %c0_i32_0 = arith.constant 0 : i32
    return %arg0, %c0_i32 : i32, i32
  }
  func.func @transform_9(%arg0: i32) -> (i32, i32) {
    %c0_i32 = arith.constant 0 : i32
    %c0_i32_0 = arith.constant 0 : i32
    return %arg0, %c0_i32 : i32, i32
  }
}

module attributes {stable_mosaic.version = 11 : i64} {
  func.func @_bn1_p2_kernel(%arg0: i32, %arg1: memref<16x512xf32, #tpu.memory_space<vmem>>, %arg2: memref<16x1xf32, #tpu.memory_space<vmem>>, %arg3: memref<1x512xf32, #tpu.memory_space<vmem>>, %arg4: memref<1x512xf32, #tpu.memory_space<vmem>>, %arg5: memref<512x32xbf16, #tpu.memory_space<vmem>>, %arg6: memref<1x32xf32, #tpu.memory_space<vmem>>, %arg7: memref<16x32xf32, #tpu.memory_space<vmem>>, %arg8: memref<8x32xf32, #tpu.memory_space<vmem>>) attributes {dimension_semantics = [#tpu.dimension_semantics<parallel>], iteration_bounds = array<i64: 1>, scalar_prefetch = 0 : i64, scratch_operands = 0 : i64, tpu.core_type = #tpu.core_type<tc>, window_params = [{transform_indices = @transform_0, window_bounds = array<i64: 16, 512>}, {transform_indices = @transform_1, window_bounds = array<i64: 16, 1>}, {pipeline_mode = #tpu.pipeline_mode<synchronous>, transform_indices = @transform_2, window_bounds = array<i64: 1, 512>}, {pipeline_mode = #tpu.pipeline_mode<synchronous>, transform_indices = @transform_3, window_bounds = array<i64: 1, 512>}, {pipeline_mode = #tpu.pipeline_mode<synchronous>, transform_indices = @transform_4, window_bounds = array<i64: 512, 32>}, {pipeline_mode = #tpu.pipeline_mode<synchronous>, transform_indices = @transform_5, window_bounds = array<i64: 1, 32>}, {transform_indices = @transform_6, window_bounds = array<i64: 16, 32>}, {transform_indices = @transform_7, window_bounds = array<i64: 8, 32>}]} {
    %c0 = arith.constant 0 : index
    %c0_0 = arith.constant 0 : index
    %0 = vector.load %arg1[%c0, %c0_0] : memref<16x512xf32, #tpu.memory_space<vmem>>, vector<16x512xf32>
    %c0_1 = arith.constant 0 : index
    %c0_2 = arith.constant 0 : index
    %1 = vector.load %arg3[%c0_1, %c0_2] : memref<1x512xf32, #tpu.memory_space<vmem>>, vector<1x512xf32>
    %2 = vector.broadcast %1 : vector<1x512xf32> to vector<16x512xf32>
    %3 = arith.mulf %0, %2 : vector<16x512xf32>
    %c0_3 = arith.constant 0 : index
    %c0_4 = arith.constant 0 : index
    %4 = vector.load %arg4[%c0_3, %c0_4] : memref<1x512xf32, #tpu.memory_space<vmem>>, vector<1x512xf32>
    %5 = vector.broadcast %4 : vector<1x512xf32> to vector<16x512xf32>
    %6 = arith.addf %3, %5 : vector<16x512xf32>
    %cst = arith.constant 0.000000e+00 : f32
    %7 = vector.broadcast %cst : f32 to vector<16x512xf32>
    %8 = arith.maximumf %6, %7 : vector<16x512xf32>
    %9 = arith.truncf %8 : vector<16x512xf32> to vector<16x512xbf16>
    %c0_5 = arith.constant 0 : index
    %c0_6 = arith.constant 0 : index
    %10 = vector.load %arg5[%c0_5, %c0_6] : memref<512x32xbf16, #tpu.memory_space<vmem>>, vector<512x32xbf16>
    %cst_7 = arith.constant dense<0.000000e+00> : vector<16x32xf32>
    %11 = tpu.matmul %9, %10, %cst_7 {dimension_numbers = #tpu.dot_dimension_numbers<[1], [0], [0], [1], [0, 0, 1, 1], [], []>} : vector<16x512xbf16>, vector<512x32xbf16>, vector<16x32xf32> -> vector<16x32xf32>
    %c0_8 = arith.constant 0 : index
    %c0_9 = arith.constant 0 : index
    %12 = vector.load %arg6[%c0_8, %c0_9] : memref<1x32xf32, #tpu.memory_space<vmem>>, vector<1x32xf32>
    %13 = vector.broadcast %12 : vector<1x32xf32> to vector<16x32xf32>
    %14 = arith.addf %11, %13 : vector<16x32xf32>
    %c0_10 = arith.constant 0 : index
    %c0_11 = arith.constant 0 : index
    %15 = vector.load %arg7[%c0_10, %c0_11] : memref<16x32xf32, #tpu.memory_space<vmem>>, vector<16x32xf32>
    tpu.vector_store %arg7[%c0_10, %c0_11], %14 {strides = array<i32>} : memref<16x32xf32, #tpu.memory_space<vmem>>, vector<16x32xf32>,
    %c0_12 = arith.constant 0 : index
    %c0_13 = arith.constant 0 : index
    %16 = vector.load %arg2[%c0_12, %c0_13] : memref<16x1xf32, #tpu.memory_space<vmem>>, vector<16x1xf32>
    %17 = vector.broadcast %16 : vector<16x1xf32> to vector<16x32xf32>
    %18 = arith.mulf %14, %17 : vector<16x32xf32>
    %cst_14 = arith.constant 0.000000e+00 : f32
    %19 = vector.broadcast %cst_14 : f32 to vector<8x32xf32>
    %c0_15 = arith.constant 0 : index
    %c0_16 = arith.constant 0 : index
    %20 = vector.load %arg8[%c0_15, %c0_16] : memref<8x32xf32, #tpu.memory_space<vmem>>, vector<8x32xf32>
    tpu.vector_store %arg8[%c0_15, %c0_16], %19 {strides = array<i32>} : memref<8x32xf32, #tpu.memory_space<vmem>>, vector<8x32xf32>,
    %cst_17 = arith.constant dense<0.000000e+00> : vector<32xf32>
    %21 = vector.multi_reduction <add>, %18, %cst_17 [0] : vector<16x32xf32> to vector<32xf32>
    %22 = vector.shape_cast %21 : vector<32xf32> to vector<1x32xf32>
    %c0_18 = arith.constant 0 : index
    %c0_19 = arith.constant 0 : index
    %23 = vector.load %arg8[%c0_18, %c0_19] : memref<8x32xf32, #tpu.memory_space<vmem>>, vector<1x32xf32>
    tpu.vector_store %arg8[%c0_18, %c0_19], %22 {strides = array<i32>} : memref<8x32xf32, #tpu.memory_space<vmem>>, vector<1x32xf32>,
    %24 = arith.mulf %18, %14 : vector<16x32xf32>
    %cst_20 = arith.constant dense<0.000000e+00> : vector<32xf32>
    %25 = vector.multi_reduction <add>, %24, %cst_20 [0] : vector<16x32xf32> to vector<32xf32>
    %26 = vector.shape_cast %25 : vector<32xf32> to vector<1x32xf32>
    %c1 = arith.constant 1 : index
    %c0_21 = arith.constant 0 : index
    %27 = vector.load %arg8[%c1, %c0_21] : memref<8x32xf32, #tpu.memory_space<vmem>>, vector<1x32xf32>
    tpu.vector_store %arg8[%c1, %c0_21], %26 {strides = array<i32>} : memref<8x32xf32, #tpu.memory_space<vmem>>, vector<1x32xf32>,
    return
  }
  func.func @transform_0(%arg0: i32) -> (i32, i32) {
    %c0_i32 = arith.constant 0 : i32
    %c0_i32_0 = arith.constant 0 : i32
    return %arg0, %c0_i32 : i32, i32
  }
  func.func @transform_1(%arg0: i32) -> (i32, i32) {
    %c0_i32 = arith.constant 0 : i32
    %c0_i32_0 = arith.constant 0 : i32
    return %arg0, %c0_i32 : i32, i32
  }
  func.func @transform_2(%arg0: i32) -> (i32, i32) {
    %c0_i32 = arith.constant 0 : i32
    %c0_i32_0 = arith.constant 0 : i32
    %c0_i32_1 = arith.constant 0 : i32
    return %c0_i32, %c0_i32_0 : i32, i32
  }
  func.func @transform_3(%arg0: i32) -> (i32, i32) {
    %c0_i32 = arith.constant 0 : i32
    %c0_i32_0 = arith.constant 0 : i32
    %c0_i32_1 = arith.constant 0 : i32
    return %c0_i32, %c0_i32_0 : i32, i32
  }
  func.func @transform_4(%arg0: i32) -> (i32, i32) {
    %c0_i32 = arith.constant 0 : i32
    %c0_i32_0 = arith.constant 0 : i32
    %c0_i32_1 = arith.constant 0 : i32
    return %c0_i32, %c0_i32_0 : i32, i32
  }
  func.func @transform_5(%arg0: i32) -> (i32, i32) {
    %c0_i32 = arith.constant 0 : i32
    %c0_i32_0 = arith.constant 0 : i32
    %c0_i32_1 = arith.constant 0 : i32
    return %c0_i32, %c0_i32_0 : i32, i32
  }
  func.func @transform_6(%arg0: i32) -> (i32, i32) {
    %c0_i32 = arith.constant 0 : i32
    %c0_i32_0 = arith.constant 0 : i32
    return %arg0, %c0_i32 : i32, i32
  }
  func.func @transform_7(%arg0: i32) -> (i32, i32) {
    %c0_i32 = arith.constant 0 : i32
    %c0_i32_0 = arith.constant 0 : i32
    return %arg0, %c0_i32 : i32, i32
  }
}

module attributes {stable_mosaic.version = 11 : i64} {
  func.func @_bn2_relu_kernel(%arg0: i32, %arg1: memref<4x128xf32, #tpu.memory_space<vmem>>, %arg2: memref<1x128xf32, #tpu.memory_space<vmem>>, %arg3: memref<1x128xf32, #tpu.memory_space<vmem>>, %arg4: memref<4x128xf32, #tpu.memory_space<vmem>>) attributes {dimension_semantics = [#tpu.dimension_semantics<parallel>], iteration_bounds = array<i64: 1>, scalar_prefetch = 0 : i64, scratch_operands = 0 : i64, tpu.core_type = #tpu.core_type<tc>, window_params = [{transform_indices = @transform_0, window_bounds = array<i64: 4, 128>}, {pipeline_mode = #tpu.pipeline_mode<synchronous>, transform_indices = @transform_1, window_bounds = array<i64: 1, 128>}, {pipeline_mode = #tpu.pipeline_mode<synchronous>, transform_indices = @transform_2, window_bounds = array<i64: 1, 128>}, {transform_indices = @transform_3, window_bounds = array<i64: 4, 128>}]} {
    %c0 = arith.constant 0 : index
    %c0_0 = arith.constant 0 : index
    %0 = vector.load %arg1[%c0, %c0_0] : memref<4x128xf32, #tpu.memory_space<vmem>>, vector<4x128xf32>
    %c0_1 = arith.constant 0 : index
    %c0_2 = arith.constant 0 : index
    %1 = vector.load %arg2[%c0_1, %c0_2] : memref<1x128xf32, #tpu.memory_space<vmem>>, vector<1x128xf32>
    %2 = vector.broadcast %1 : vector<1x128xf32> to vector<4x128xf32>
    %3 = arith.mulf %0, %2 : vector<4x128xf32>
    %c0_3 = arith.constant 0 : index
    %c0_4 = arith.constant 0 : index
    %4 = vector.load %arg3[%c0_3, %c0_4] : memref<1x128xf32, #tpu.memory_space<vmem>>, vector<1x128xf32>
    %5 = vector.broadcast %4 : vector<1x128xf32> to vector<4x128xf32>
    %6 = arith.addf %3, %5 : vector<4x128xf32>
    %cst = arith.constant 0.000000e+00 : f32
    %7 = vector.broadcast %cst : f32 to vector<4x128xf32>
    %8 = arith.maximumf %6, %7 : vector<4x128xf32>
    %c0_5 = arith.constant 0 : index
    %c0_6 = arith.constant 0 : index
    %9 = vector.load %arg4[%c0_5, %c0_6] : memref<4x128xf32, #tpu.memory_space<vmem>>, vector<4x128xf32>
    tpu.vector_store %arg4[%c0_5, %c0_6], %8 {strides = array<i32>} : memref<4x128xf32, #tpu.memory_space<vmem>>, vector<4x128xf32>,
    return
  }
  func.func @transform_0(%arg0: i32) -> (i32, i32) {
    %c0_i32 = arith.constant 0 : i32
    %c0_i32_0 = arith.constant 0 : i32
    return %arg0, %c0_i32 : i32, i32
  }
  func.func @transform_1(%arg0: i32) -> (i32, i32) {
    %c0_i32 = arith.constant 0 : i32
    %c0_i32_0 = arith.constant 0 : i32
    %c0_i32_1 = arith.constant 0 : i32
    return %c0_i32, %c0_i32_0 : i32, i32
  }
  func.func @transform_2(%arg0: i32) -> (i32, i32) {
    %c0_i32 = arith.constant 0 : i32
    %c0_i32_0 = arith.constant 0 : i32
    %c0_i32_1 = arith.constant 0 : i32
    return %c0_i32, %c0_i32_0 : i32, i32
  }
  func.func @transform_3(%arg0: i32) -> (i32, i32) {
    %c0_i32 = arith.constant 0 : i32
    %c0_i32_0 = arith.constant 0 : i32
    return %arg0, %c0_i32 : i32, i32
  }
}

</mosaic_0001>

<llo_original>
// kernel: atten_pool_forward.5
$region0: #{atten_pool_forward.5}
  #allocation0 [shape = 'u32[]', space=smem, size = 0x4, offset = 0x4, fixed_abs, tag = 'smem constant byte address 0x4 - core index']
  #allocation1 [shape = 'u32[72,128]{1,0:T(1,128)}', space=vmem, size = 0x9000, scoped, tag = 'internal scratch']
  %s0 = inlined_call_operand.vmem [shape: f32[4,128], index: 0, kind: input, shape index: {}]
  %s1 = inlined_call_operand.vmem [shape: f32[1,128], index: 1, kind: input, shape index: {}]
  %s2 = inlined_call_operand.vmem [shape: f32[1,128], index: 2, kind: input, shape index: {}]
  %s3 = inlined_call_operand.vmem [shape: f32[4,128], index: 3, kind: output, shape index: {}]
  %s4 = sld [smem:[#allocation0]]
  $region22: #{atten_pool_forward.5} parent=0
    _
  %s6 = ssub.s32 1, %s4
  %s7 = scalar_select 0, %s6, %s4
  // Predicated region
  $region2: #{atten_pool_forward.5} parent=0 // pred_check
    _
  $region3: #{atten_pool_forward.5} parent=0 // pred_check_branch
    %9 = sbr.rel (0) target = $region5
  $region4: #{atten_pool_forward.5} parent=0 // pred_region
    _
  $region5: #{atten_pool_forward.5} parent=0 // pred_fallthru
    _
  // Predicated region
  $region6: #{atten_pool_forward.5} parent=0 // pred_check
    _
  $region7: #{atten_pool_forward.5} parent=0 // pred_check_branch
    %11 = sbr.rel (0) target = $region9
  $region8: #{atten_pool_forward.5} parent=0 // pred_region
    _
  $region9: #{atten_pool_forward.5} parent=0 // pred_fallthru
    _
  // Predicated region
  $region10: #{atten_pool_forward.5} parent=0 // pred_check
    _
  $region11: #{atten_pool_forward.5} parent=0 // pred_check_branch
    %13 = sbr.rel (0) target = $region13
  $region12: #{atten_pool_forward.5} parent=0 // pred_region
    _
  $region13: #{atten_pool_forward.5} parent=0 // pred_fallthru
    _
  %v14 = vld [vmem:[%s0] sm:$0xf]
  %v15 = vld [vmem:[%s1] sm:$0x1]
  %v17 = vperm.slane %v15, 0
  %v19 = vmul.f32 %v14, %v17
  %v20 = vld [vmem:[%s2] sm:$0x1]
  %v22 = vperm.slane %v20, 0
  %v24 = vadd.f32 %v19, %v22
  %v25 = vmax.f32 %v24, 0.0
  %26 = vst [vmem:[%s3] sm:$0xf] %v25
  // Predicated region
  $region14: #{atten_pool_forward.5} parent=0 // pred_check
    _
  $region15: #{atten_pool_forward.5} parent=0 // pred_check_branch
    %28 = sbr.rel (0) target = $region17
  $region16: #{atten_pool_forward.5} parent=0 // pred_region
    _
  $region17: #{atten_pool_forward.5} parent=0 // pred_fallthru
    _
  // Predicated region
  $region18: #{atten_pool_forward.5} parent=0 // pred_check
    _
  $region19: #{atten_pool_forward.5} parent=0 // pred_check_branch
    %30 = sbr.rel (0) target = $region21
  $region20: #{atten_pool_forward.5} parent=0 // pred_region
    _
  $region21: #{atten_pool_forward.5} parent=0 // pred_fallthru
    _

// kernel: atten_pool_forward.3
$region0: #{atten_pool_forward.3}
  #allocation0 [shape = 'u32[]', space=smem, size = 0x4, offset = 0x4, fixed_abs, tag = 'smem constant byte address 0x4 - core index']
  #allocation1 [shape = 'u32[72,128]{1,0:T(1,128)}', space=vmem, size = 0x9000, scoped, tag = 'internal scratch']
  %s0 = inlined_call_operand.vmem [shape: f32[16,4], index: 0, kind: input, shape index: {}]
  %s1 = inlined_call_operand.vmem [shape: bf16[16,32], index: 1, kind: input, shape index: {}]
  %s2 = inlined_call_operand.vmem [shape: f32[16,1], index: 2, kind: input, shape index: {}]
  %s3 = inlined_call_operand.hbm [shape: f32[2,32], index: 3, kind: input, shape index: {}]
  %s4 = inlined_call_operand.hbm [shape: f32[1,32], index: 4, kind: input, shape index: {}]
  %s5 = inlined_call_operand.vmem [shape: bf16[32,512], index: 5, kind: input, shape index: {}]
  %s6 = inlined_call_operand.hbm [shape: bf16[32,512], index: 6, kind: input, shape index: {}]
  %s7 = inlined_call_operand.vmem [shape: f32[1,512], index: 7, kind: input, shape index: {}]
  %s8 = inlined_call_operand.vmem [shape: f32[16,512], index: 8, kind: output, shape index: {0}]
  %s9 = inlined_call_operand.vmem [shape: f32[8,512], index: 9, kind: output, shape index: {1}]
  %10 = xla_tuple %s8, %s9
  %s11 = sld [smem:[#allocation0]]
  $region62: #{atten_pool_forward.3} parent=0
    _
  %s13 = ssub.s32 1, %s11
  %s14 = scalar_select 0, %s13, %s11
  $region1: #{atten_pool_forward.3} parent=0
    #allocation2 [shape = 'u8[1024]{0}', space=vmem, size = 0x400, scoped, tag = 'input window, operand 3, single buffered']
    #allocation3 [shape = 's32[1]{0}', space=sflag, size = 0x4, scoped, tag = 'scoped memory for atten_pool_forward.3']
    #allocation4 [shape = 'u8[512]{0}', space=vmem, size = 0x400, scoped, tag = 'input window, operand 4, single buffered']
    #allocation5 [shape = 's32[1]{0}', space=sflag, size = 0x4, scoped, tag = 'scoped memory for atten_pool_forward.3']
    #allocation6 [shape = 'u8[32768]{0}', space=vmem, size = 0x8000, scoped, tag = 'input window, operand 6, single buffered']
    %15 = vsyncpa [#allocation3], 0
    %16 = vsyncpa [#allocation5], 0
    // Predicated region
    $region2: #{atten_pool_forward.3} parent=1 // pred_check
      _
    $region3: #{atten_pool_forward.3} parent=1 // pred_check_branch
      %18 = sbr.rel (0) target = $region5
    $region4: #{atten_pool_forward.3} parent=1 // pred_region
      _
    $region5: #{atten_pool_forward.3} parent=1 // pred_fallthru
      _
    // Predicated region
    $region6: #{atten_pool_forward.3} parent=1 // pred_check
      _
    $region7: #{atten_pool_forward.3} parent=1 // pred_check_branch
      %20 = sbr.rel (0) target = $region9
    $region8: #{atten_pool_forward.3} parent=1 // pred_region
      _
    $region9: #{atten_pool_forward.3} parent=1 // pred_fallthru
      _
    // Predicated region
    $region10: #{atten_pool_forward.3} parent=1 // pred_check
      _
    $region11: #{atten_pool_forward.3} parent=1 // pred_check_branch
      %22 = sbr.rel (0) target = $region13
    $region12: #{atten_pool_forward.3} parent=1 // pred_region
      _
    $region13: #{atten_pool_forward.3} parent=1 // pred_fallthru
      _
    // Predicated region
    $region14: #{atten_pool_forward.3} parent=1 // pred_check
      _
    $region15: #{atten_pool_forward.3} parent=1 // pred_check_branch
      %24 = sbr.rel (0) target = $region17
    $region16: #{atten_pool_forward.3} parent=1 // pred_region
      %26 = vsyncadd [#allocation3], 0
      %s28 = sshll.u32 %s3, 4
      %s29 = int_to_ptr.hbm [resolvable:$true] %s28
      %s30 = sshll.u32 [#allocation2], 4
      %s31 = int_to_ptr.vmem [resolvable:$true] %s30
      %33 = dma.hbm_to_vmem [thread:$0]  %s29, 32, %s31, [#allocation3]
    $region17: #{atten_pool_forward.3} parent=1 // pred_fallthru
      _
    // Predicated region
    $region18: #{atten_pool_forward.3} parent=1 // pred_check
      _
    $region19: #{atten_pool_forward.3} parent=1 // pred_check_branch
      %35 = sbr.rel (0) target = $region21
    $region20: #{atten_pool_forward.3} parent=1 // pred_region
      %37 = vsyncadd [#allocation5], 0
      %s39 = sshll.u32 %s4, 4
      %s40 = int_to_ptr.hbm [resolvable:$true] %s39
      %s41 = sshll.u32 [#allocation4], 4
      %s42 = int_to_ptr.vmem [resolvable:$true] %s41
      %44 = dma.hbm_to_vmem [thread:$0]  %s40, 16, %s42, [#allocation5]
    $region21: #{atten_pool_forward.3} parent=1 // pred_fallthru
      _
    // Predicated region
    $region22: #{atten_pool_forward.3} parent=1 // pred_check
      _
    $region23: #{atten_pool_forward.3} parent=1 // pred_check_branch
      %46 = sbr.rel (0) target = $region25
    $region24: #{atten_pool_forward.3} parent=1 // pred_region
      _
    $region25: #{atten_pool_forward.3} parent=1 // pred_fallthru
      _
    // Predicated region
    $region26: #{atten_pool_forward.3} parent=1 // pred_check
      _
    $region27: #{atten_pool_forward.3} parent=1 // pred_check_branch
      %48 = sbr.rel (0) target = $region29
    $region28: #{atten_pool_forward.3} parent=1 // pred_region
      %50 = vsyncadd [#allocation5], 0
      %s51 = sshll.u32 %s6, 4
      %s52 = int_to_ptr.hbm [resolvable:$true] %s51
      %s53 = sshll.u32 [#allocation6], 4
      %s54 = int_to_ptr.vmem [resolvable:$true] %s53
      %59 = dma.hbm_to_vmem [thread:$0]  %s52, 1024, %s54, [#allocation5], 256, 256, 16
    $region29: #{atten_pool_forward.3} parent=1 // pred_fallthru
      _
    // Predicated region
    $region30: #{atten_pool_forward.3} parent=1 // pred_check
      _
    $region31: #{atten_pool_forward.3} parent=1 // pred_check_branch
      %61 = sbr.rel (0) target = $region33
    $region32: #{atten_pool_forward.3} parent=1 // pred_region
      _
    $region33: #{atten_pool_forward.3} parent=1 // pred_fallthru
      _
    // Predicated region
    $region34: #{atten_pool_forward.3} parent=1 // pred_check
      _
    $region35: #{atten_pool_forward.3} parent=1 // pred_check_branch
      %63 = sbr.rel (0) target = $region37
    $region36: #{atten_pool_forward.3} parent=1 // pred_region
      %65 = dma.done [#allocation3], 32
    $region37: #{atten_pool_forward.3} parent=1 // pred_fallthru
      _
    // Predicated region
    $region38: #{atten_pool_forward.3} parent=1 // pred_check
      _
    $region39: #{atten_pool_forward.3} parent=1 // pred_check_branch
      %67 = sbr.rel (0) target = $region41
    $region40: #{atten_pool_forward.3} parent=1 // pred_region
      %69 = dma.done [#allocation5], 16
    $region41: #{atten_pool_forward.3} parent=1 // pred_fallthru
      _
    // Predicated region
    $region42: #{atten_pool_forward.3} parent=1 // pred_check
      _
    $region43: #{atten_pool_forward.3} parent=1 // pred_check_branch
      %71 = sbr.rel (0) target = $region45
    $region44: #{atten_pool_forward.3} parent=1 // pred_region
      %73 = dma.done [#allocation5], 1024
    $region45: #{atten_pool_forward.3} parent=1 // pred_fallthru
      _
    %v75 = vld [vmem:[%s0] sm:$0xff]
    %v76 = vld [vmem:[%s0 + $0x8] sm:$0xff]
    %v77 = vld [vmem:[#allocation2] sm:$0x3]
    %79 = vset.pattern.permute.xlu0 0
    %80 = vperm.xlu0 %79, %v75
    %v81 = vpop.permute.xlu0 %80
    %84 = vset.pattern.permute.xlu0 0
    %85 = vperm.xlu0 %84, %v76
    %v86 = vpop.permute.xlu0 %85
    %v88 = vperm.slane %v77, 0
    %v89 = vmul.f32 %v81, %v88
    %v90 = vmul.f32 %v86, %v88
    %91 = vset.pattern.permute.xlu0 1
    %92 = vperm.xlu0 %91, %v75
    %v93 = vpop.permute.xlu0 %92
    %95 = vset.pattern.permute.xlu0 1
    %96 = vperm.xlu0 %95, %v76
    %v97 = vpop.permute.xlu0 %96
    %v99 = vperm.slane %v77, 1
    %v100 = vmul.f32 %v93, %v99
    %v101 = vmul.f32 %v97, %v99
    %v102 = vadd.f32 %v89, %v100
    %v103 = vadd.f32 %v90, %v101
    %v104 = vld [vmem:[#allocation4] sm:$0x1]
    %v106 = vperm.slane %v104, 0
    %v108 = vadd.f32 %v102, %v106
    %v109 = vadd.f32 %v103, %v106
    %v110 = vpack.c.bf16 %v109, %v108
    %v111 = vld [vmem:[%s5] sm:$0xff]
    %v112 = vld [vmem:[%s5 + $0x8] sm:$0xff]
    %v113 = vld [vmem:[%s5 + $0x10] sm:$0xff]
    %v114 = vld [vmem:[%s5 + $0x18] sm:$0xff]
    %v115 = vld [vmem:[%s5 + $0x20] sm:$0xff]
    %v116 = vld [vmem:[%s5 + $0x28] sm:$0xff]
    %v117 = vld [vmem:[%s5 + $0x30] sm:$0xff]
    %v118 = vld [vmem:[%s5 + $0x38] sm:$0xff]
    %v119 = vld [vmem:[%s1] sm:$0xf]
    %v120 = vld [vmem:[%s1 + $0x4] sm:$0xf]
    %v121 = vld [vmem:[#allocation6] sm:$0xff]
    %v122 = vld [vmem:[#allocation6 + $0x8] sm:$0xff]
    %v123 = vld [vmem:[#allocation6 + $0x10] sm:$0xff]
    %v124 = vld [vmem:[#allocation6 + $0x18] sm:$0xff]
    %v125 = vld [vmem:[#allocation6 + $0x20] sm:$0xff]
    %v126 = vld [vmem:[#allocation6 + $0x28] sm:$0xff]
    %v127 = vld [vmem:[#allocation6 + $0x30] sm:$0xff]
    %v128 = vld [vmem:[#allocation6 + $0x38] sm:$0xff]
    %v131 = vunpack.c.l.b16 %v119
    %v132 = vunpack.c.l.b16 %v120
    %v133 = vpack.c.b16 %v132, %v131
    %v142 = vunpack.c.l.b16 %v121
    %v143 = vunpack.c.h.b16 %v121
    %v144 = vunpack.c.l.b16 %v122
    %v145 = vunpack.c.h.b16 %v122
    %v146 = vunpack.c.l.b16 %v123
    %v147 = vunpack.c.h.b16 %v123
    %v148 = vunpack.c.l.b16 %v124
    %v149 = vunpack.c.h.b16 %v124
    %v150 = vunpack.c.l.b16 %v125
    %v151 = vunpack.c.h.b16 %v125
    %v152 = vunpack.c.l.b16 %v126
    %v153 = vunpack.c.h.b16 %v126
    %v154 = vunpack.c.l.b16 %v127
    %v155 = vunpack.c.h.b16 %v127
    %v156 = vunpack.c.l.b16 %v128
    %v157 = vunpack.c.h.b16 %v128
    %v158 = vpack.c.b16 %v146, %v142
    %v159 = vpack.c.b16 %v147, %v143
    %v160 = vpack.c.b16 %v148, %v144
    %v161 = vpack.c.b16 %v149, %v145
    %v162 = vpack.c.b16 %v154, %v150
    %v163 = vpack.c.b16 %v155, %v151
    %v164 = vpack.c.b16 %v156, %v152
    %v165 = vpack.c.b16 %v157, %v153
    %vm174 = vcmask 261120
    %v176 = vsel %vm174, %v133, 0
    %178 = vmatpush.bf16.msra.mxu0 0
    %179 = vmatpush.bf16.msra.mxu0 0
    %180 = vmatpush.bf16.msra.mxu0 0
    %181 = vmatpush.bf16.msra.mxu0 0
    %182 = vmatpush.bf16.msra.mxu0 0
    %183 = vmatpush.bf16.msra.mxu0 0
    %184 = vmatpush.bf16.msra.mxu0 %v162
    %185 = vmatpush.bf16.msra.mxu0 %v158
    %186 = vmatmul.bf16.gmra.mxu0 %v176
    %v187 = vpop.f32.mrf.mxu0
    %v188 = vadd.f32 0.0, %v187
    %v189 = vpop.f32.mrf.mxu0
    %v190 = vadd.f32 0.0, %v189
    %191 = vdwg.mxu0
    %192 = vmatpush.bf16.msra.mxu0 0
    %193 = vmatpush.bf16.msra.mxu0 0
    %194 = vmatpush.bf16.msra.mxu0 0
    %195 = vmatpush.bf16.msra.mxu0 0
    %196 = vmatpush.bf16.msra.mxu0 0
    %197 = vmatpush.bf16.msra.mxu0 0
    %198 = vmatpush.bf16.msra.mxu0 %v163
    %199 = vmatpush.bf16.msra.mxu0 %v159
    %200 = vmatmul.bf16.gmra.mxu0 %v176
    %v201 = vpop.f32.mrf.mxu0
    %v202 = vadd.f32 0.0, %v201
    %v203 = vpop.f32.mrf.mxu0
    %v204 = vadd.f32 0.0, %v203
    %205 = vdwg.mxu0
    %206 = vmatpush.bf16.msra.mxu0 0
    %207 = vmatpush.bf16.msra.mxu0 0
    %208 = vmatpush.bf16.msra.mxu0 0
    %209 = vmatpush.bf16.msra.mxu0 0
    %210 = vmatpush.bf16.msra.mxu0 0
    %211 = vmatpush.bf16.msra.mxu0 0
    %212 = vmatpush.bf16.msra.mxu0 %v164
    %213 = vmatpush.bf16.msra.mxu0 %v160
    %214 = vmatmul.bf16.gmra.mxu0 %v176
    %v215 = vpop.f32.mrf.mxu0
    %v216 = vadd.f32 0.0, %v215
    %v217 = vpop.f32.mrf.mxu0
    %v218 = vadd.f32 0.0, %v217
    %219 = vdwg.mxu0
    %220 = vmatpush.bf16.msra.mxu0 0
    %221 = vmatpush.bf16.msra.mxu0 0
    %222 = vmatpush.bf16.msra.mxu0 0
    %223 = vmatpush.bf16.msra.mxu0 0
    %224 = vmatpush.bf16.msra.mxu0 0
    %225 = vmatpush.bf16.msra.mxu0 0
    %226 = vmatpush.bf16.msra.mxu0 %v165
    %227 = vmatpush.bf16.msra.mxu0 %v161
    %228 = vmatmul.bf16.gmra.mxu0 %v176
    %v229 = vpop.f32.mrf.mxu0
    %v230 = vadd.f32 0.0, %v229
    %v231 = vpop.f32.mrf.mxu0
    %v232 = vadd.f32 0.0, %v231
    %233 = vdwg.mxu0
    %v242 = vunpack.c.l.b16 %v111
    %v243 = vunpack.c.h.b16 %v111
    %v244 = vunpack.c.l.b16 %v112
    %v245 = vunpack.c.h.b16 %v112
    %v246 = vunpack.c.l.b16 %v113
    %v247 = vunpack.c.h.b16 %v113
    %v248 = vunpack.c.l.b16 %v114
    %v249 = vunpack.c.h.b16 %v114
    %v250 = vunpack.c.l.b16 %v115
    %v251 = vunpack.c.h.b16 %v115
    %v252 = vunpack.c.l.b16 %v116
    %v253 = vunpack.c.h.b16 %v116
    %v254 = vunpack.c.l.b16 %v117
    %v255 = vunpack.c.h.b16 %v117
    %v256 = vunpack.c.l.b16 %v118
    %v257 = vunpack.c.h.b16 %v118
    %v258 = vpack.c.b16 %v246, %v242
    %v259 = vpack.c.b16 %v247, %v243
    %v260 = vpack.c.b16 %v248, %v244
    %v261 = vpack.c.b16 %v249, %v245
    %v262 = vpack.c.b16 %v254, %v250
    %v263 = vpack.c.b16 %v255, %v251
    %v264 = vpack.c.b16 %v256, %v252
    %v265 = vpack.c.b16 %v257, %v253
    %v275 = vsel %vm174, %v110, 0
    %277 = vmatpush.bf16.msra.mxu0 0
    %278 = vmatpush.bf16.msra.mxu0 0
    %279 = vmatpush.bf16.msra.mxu0 0
    %280 = vmatpush.bf16.msra.mxu0 0
    %281 = vmatpush.bf16.msra.mxu0 0
    %282 = vmatpush.bf16.msra.mxu0 0
    %283 = vmatpush.bf16.msra.mxu0 %v262
    %284 = vmatpush.bf16.msra.mxu0 %v258
    %285 = vmatmul.bf16.gmra.mxu0 %v275
    %v286 = vpop.f32.mrf.mxu0
    %v287 = vadd.f32 %v188, %v286
    %v288 = vpop.f32.mrf.mxu0
    %v289 = vadd.f32 %v190, %v288
    %290 = vdwg.mxu0
    %291 = vmatpush.bf16.msra.mxu0 0
    %292 = vmatpush.bf16.msra.mxu0 0
    %293 = vmatpush.bf16.msra.mxu0 0
    %294 = vmatpush.bf16.msra.mxu0 0
    %295 = vmatpush.bf16.msra.mxu0 0
    %296 = vmatpush.bf16.msra.mxu0 0
    %297 = vmatpush.bf16.msra.mxu0 %v263
    %298 = vmatpush.bf16.msra.mxu0 %v259
    %299 = vmatmul.bf16.gmra.mxu0 %v275
    %v300 = vpop.f32.mrf.mxu0
    %v301 = vadd.f32 %v202, %v300
    %v302 = vpop.f32.mrf.mxu0
    %v303 = vadd.f32 %v204, %v302
    %304 = vdwg.mxu0
    %305 = vmatpush.bf16.msra.mxu0 0
    %306 = vmatpush.bf16.msra.mxu0 0
    %307 = vmatpush.bf16.msra.mxu0 0
    %308 = vmatpush.bf16.msra.mxu0 0
    %309 = vmatpush.bf16.msra.mxu0 0
    %310 = vmatpush.bf16.msra.mxu0 0
    %311 = vmatpush.bf16.msra.mxu0 %v264
    %312 = vmatpush.bf16.msra.mxu0 %v260
    %313 = vmatmul.bf16.gmra.mxu0 %v275
    %v314 = vpop.f32.mrf.mxu0
    %v315 = vadd.f32 %v216, %v314
    %v316 = vpop.f32.mrf.mxu0
    %v317 = vadd.f32 %v218, %v316
    %318 = vdwg.mxu0
    %319 = vmatpush.bf16.msra.mxu0 0
    %320 = vmatpush.bf16.msra.mxu0 0
    %321 = vmatpush.bf16.msra.mxu0 0
    %322 = vmatpush.bf16.msra.mxu0 0
    %323 = vmatpush.bf16.msra.mxu0 0
    %324 = vmatpush.bf16.msra.mxu0 0
    %325 = vmatpush.bf16.msra.mxu0 %v265
    %326 = vmatpush.bf16.msra.mxu0 %v261
    %327 = vmatmul.bf16.gmra.mxu0 %v275
    %v328 = vpop.f32.mrf.mxu0
    %v329 = vadd.f32 %v230, %v328
    %v330 = vpop.f32.mrf.mxu0
    %v331 = vadd.f32 %v232, %v330
    %332 = vdwg.mxu0
    %v333 = vld [vmem:[%s7] sm:$0xf]
    %v335 = vperm.slane %v333, 0
    %v336 = vperm.slane %v333, 1
    %v337 = vperm.slane %v333, 2
    %v338 = vperm.slane %v333, 3
    %v343 = vadd.f32 %v287, %v335
    %v344 = vadd.f32 %v301, %v336
    %v345 = vadd.f32 %v315, %v337
    %v346 = vadd.f32 %v329, %v338
    %v347 = vadd.f32 %v289, %v335
    %v348 = vadd.f32 %v303, %v336
    %v349 = vadd.f32 %v317, %v337
    %v350 = vadd.f32 %v331, %v338
    %351 = vst [vmem:[%s8] sm:$0xff] %v343
    %352 = vst [vmem:[%s8 + $0x8] sm:$0xff] %v344
    %353 = vst [vmem:[%s8 + $0x10] sm:$0xff] %v345
    %354 = vst [vmem:[%s8 + $0x18] sm:$0xff] %v346
    %355 = vst [vmem:[%s8 + $0x20] sm:$0xff] %v347
    %356 = vst [vmem:[%s8 + $0x28] sm:$0xff] %v348
    %357 = vst [vmem:[%s8 + $0x30] sm:$0xff] %v349
    %358 = vst [vmem:[%s8 + $0x38] sm:$0xff] %v350
    %v359 = vld [vmem:[%s2] sm:$0xff]
    %v360 = vld [vmem:[%s2 + $0x8] sm:$0xff]
    %362 = vset.pattern.permute.xlu0 0
    %363 = vperm.xlu0 %362, %v359
    %v364 = vpop.permute.xlu0 %363
    %367 = vset.pattern.permute.xlu0 0
    %368 = vperm.xlu0 %367, %v360
    %v369 = vpop.permute.xlu0 %368
    %v371 = vmul.f32 %v343, %v364
    %v372 = vmul.f32 %v344, %v364
    %v373 = vmul.f32 %v345, %v364
    %v374 = vmul.f32 %v346, %v364
    %v375 = vmul.f32 %v347, %v369
    %v376 = vmul.f32 %v348, %v369
    %v377 = vmul.f32 %v349, %v369
    %v378 = vmul.f32 %v350, %v369
    %379 = vst [vmem:[%s9] sm:$0xff] 0.0
    %380 = vst [vmem:[%s9 + $0x8] sm:$0xff] 0.0
    %381 = vst [vmem:[%s9 + $0x10] sm:$0xff] 0.0
    %382 = vst [vmem:[%s9 + $0x18] sm:$0xff] 0.0
    %v383 = vadd.f32 %v371, %v375
    %v384 = vrot.slane %v383, 4
    %v385 = vadd.f32 %v383, %v384
    %v386 = vrot.slane %v385, 2
    %v387 = vadd.f32 %v385, %v386
    %v388 = vrot.slane %v387, 1
    %v389 = vadd.f32 %v387, %v388
    %v390 = vadd.f32 %v372, %v376
    %v391 = vrot.slane %v390, 4
    %v392 = vadd.f32 %v390, %v391
    %v393 = vrot.slane %v392, 2
    %v394 = vadd.f32 %v392, %v393
    %v395 = vrot.slane %v394, 1
    %v396 = vadd.f32 %v394, %v395
    %v397 = vadd.f32 %v373, %v377
    %v398 = vrot.slane %v397, 4
    %v399 = vadd.f32 %v397, %v398
    %v400 = vrot.slane %v399, 2
    %v401 = vadd.f32 %v399, %v400
    %v402 = vrot.slane %v401, 1
    %v403 = vadd.f32 %v401, %v402
    %v404 = vadd.f32 %v374, %v378
    %v405 = vrot.slane %v404, 4
    %v406 = vadd.f32 %v404, %v405
    %v407 = vrot.slane %v406, 2
    %v408 = vadd.f32 %v406, %v407
    %v409 = vrot.slane %v408, 1
    %v410 = vadd.f32 %v408, %v409
    %v415 = vrot.slane %v396, 7
    %v416 = vrot.slane %v403, 6
    %v417 = vrot.slane %v410, 5
    %vm418 = vcmask 1040384
    %v419 = vsel %vm418, %v389, %v415
    %vm420 = vcmask 1042434
    %v421 = vsel %vm420, %v416, %v417
    %vm422 = vcmask 1041408
    %v423 = vsel %vm422, %v419, %v421
    %v425 = vlaneseq
    %vm426 = vcmp.ge.s32.totalorder %v425, 0
    %vm427 = vcmp.lt.s32.totalorder %v425, 512
    %vm428 = vmand %vm426, %vm427
    %429 = vst.msk [vmem:[%s9] ss:$8 sm:$0xf] %vm428, %v423
    %430 = vst.msk [vmem:[%s9] ss:$8 sm:$0x0] %vm428, %v423
    %v431 = vmul.f32 %v371, %v343
    %v432 = vmul.f32 %v372, %v344
    %v433 = vmul.f32 %v373, %v345
    %v434 = vmul.f32 %v374, %v346
    %v435 = vmul.f32 %v375, %v347
    %v436 = vmul.f32 %v376, %v348
    %v437 = vmul.f32 %v377, %v349
    %v438 = vmul.f32 %v378, %v350
    %v439 = vadd.f32 %v431, %v435
    %v440 = vrot.slane %v439, 4
    %v441 = vadd.f32 %v439, %v440
    %v442 = vrot.slane %v441, 2
    %v443 = vadd.f32 %v441, %v442
    %v444 = vrot.slane %v443, 1
    %v445 = vadd.f32 %v443, %v444
    %v446 = vadd.f32 %v432, %v436
    %v447 = vrot.slane %v446, 4
    %v448 = vadd.f32 %v446, %v447
    %v449 = vrot.slane %v448, 2
    %v450 = vadd.f32 %v448, %v449
    %v451 = vrot.slane %v450, 1
    %v452 = vadd.f32 %v450, %v451
    %v453 = vadd.f32 %v433, %v437
    %v454 = vrot.slane %v453, 4
    %v455 = vadd.f32 %v453, %v454
    %v456 = vrot.slane %v455, 2
    %v457 = vadd.f32 %v455, %v456
    %v458 = vrot.slane %v457, 1
    %v459 = vadd.f32 %v457, %v458
    %v460 = vadd.f32 %v434, %v438
    %v461 = vrot.slane %v460, 4
    %v462 = vadd.f32 %v460, %v461
    %v463 = vrot.slane %v462, 2
    %v464 = vadd.f32 %v462, %v463
    %v465 = vrot.slane %v464, 1
    %v466 = vadd.f32 %v464, %v465
    %v471 = vrot.slane %v452, 7
    %v472 = vrot.slane %v459, 6
    %v473 = vrot.slane %v466, 5
    %v474 = vsel %vm418, %v445, %v471
    %v475 = vsel %vm420, %v472, %v473
    %v476 = vsel %vm422, %v474, %v475
    %s478 = scalar_lea.vmem %s9, 1
    %479 = vst.msk [vmem:[%s478] ss:$8 sm:$0xf] %vm428, %v476
    %480 = vst.msk [vmem:[%s478] ss:$8 sm:$0x0] %vm428, %v476
    // Predicated region
    $region46: #{atten_pool_forward.3} parent=1 // pred_check
      _
    $region47: #{atten_pool_forward.3} parent=1 // pred_check_branch
      %482 = sbr.rel (0) target = $region49
    $region48: #{atten_pool_forward.3} parent=1 // pred_region
      _
    $region49: #{atten_pool_forward.3} parent=1 // pred_fallthru
      _
    // Predicated region
    $region50: #{atten_pool_forward.3} parent=1 // pred_check
      _
    $region51: #{atten_pool_forward.3} parent=1 // pred_check_branch
      %484 = sbr.rel (0) target = $region53
    $region52: #{atten_pool_forward.3} parent=1 // pred_region
      _
    $region53: #{atten_pool_forward.3} parent=1 // pred_fallthru
      _
    // Predicated region
    $region54: #{atten_pool_forward.3} parent=1 // pred_check
      _
    $region55: #{atten_pool_forward.3} parent=1 // pred_check_branch
      %486 = sbr.rel (0) target = $region57
    $region56: #{atten_pool_forward.3} parent=1 // pred_region
      _
    $region57: #{atten_pool_forward.3} parent=1 // pred_fallthru
      _
    // Predicated region
    $region58: #{atten_pool_forward.3} parent=1 // pred_check
      _
    $region59: #{atten_pool_forward.3} parent=1 // pred_check_branch
      %488 = sbr.rel (0) target = $region61
    $region60: #{atten_pool_forward.3} parent=1 // pred_region
      _
    $region61: #{atten_pool_forward.3} parent=1 // pred_fallthru
      _
    %489 = vsyncpa [#allocation3], 1
    %490 = vsyncpa [#allocation5], 1

// kernel: atten_pool_forward.4
$region0: #{atten_pool_forward.4}
  #allocation0 [shape = 'u32[]', space=smem, size = 0x4, offset = 0x4, fixed_abs, tag = 'smem constant byte address 0x4 - core index']
  #allocation1 [shape = 'u32[72,128]{1,0:T(1,128)}', space=vmem, size = 0x9000, scoped, tag = 'internal scratch']
  %s0 = inlined_call_operand.vmem [shape: f32[16,512], index: 0, kind: input, shape index: {}]
  %s1 = inlined_call_operand.vmem [shape: f32[16,1], index: 1, kind: input, shape index: {}]
  %s2 = inlined_call_operand.vmem [shape: f32[1,512], index: 2, kind: input, shape index: {}]
  %s3 = inlined_call_operand.vmem [shape: f32[1,512], index: 3, kind: input, shape index: {}]
  %s4 = inlined_call_operand.vmem [shape: bf16[512,32], index: 4, kind: input, shape index: {}]
  %s5 = inlined_call_operand.vmem [shape: f32[1,32], index: 5, kind: input, shape index: {}]
  %s6 = inlined_call_operand.vmem [shape: f32[16,32], index: 6, kind: output, shape index: {0}]
  %s7 = inlined_call_operand.vmem [shape: f32[8,32], index: 7, kind: output, shape index: {1}]
  %8 = xla_tuple %s6, %s7
  %s9 = sld [smem:[#allocation0]]
  $region42: #{atten_pool_forward.4} parent=0
    _
  %s11 = ssub.s32 1, %s9
  %s12 = scalar_select 0, %s11, %s9
  // Predicated region
  $region2: #{atten_pool_forward.4} parent=0 // pred_check
    _
  $region3: #{atten_pool_forward.4} parent=0 // pred_check_branch
    %14 = sbr.rel (0) target = $region5
  $region4: #{atten_pool_forward.4} parent=0 // pred_region
    _
  $region5: #{atten_pool_forward.4} parent=0 // pred_fallthru
    _
  // Predicated region
  $region6: #{atten_pool_forward.4} parent=0 // pred_check
    _
  $region7: #{atten_pool_forward.4} parent=0 // pred_check_branch
    %16 = sbr.rel (0) target = $region9
  $region8: #{atten_pool_forward.4} parent=0 // pred_region
    _
  $region9: #{atten_pool_forward.4} parent=0 // pred_fallthru
    _
  // Predicated region
  $region10: #{atten_pool_forward.4} parent=0 // pred_check
    _
  $region11: #{atten_pool_forward.4} parent=0 // pred_check_branch
    %18 = sbr.rel (0) target = $region13
  $region12: #{atten_pool_forward.4} parent=0 // pred_region
    _
  $region13: #{atten_pool_forward.4} parent=0 // pred_fallthru
    _
  // Predicated region
  $region14: #{atten_pool_forward.4} parent=0 // pred_check
    _
  $region15: #{atten_pool_forward.4} parent=0 // pred_check_branch
    %20 = sbr.rel (0) target = $region17
  $region16: #{atten_pool_forward.4} parent=0 // pred_region
    _
  $region17: #{atten_pool_forward.4} parent=0 // pred_fallthru
    _
  // Predicated region
  $region18: #{atten_pool_forward.4} parent=0 // pred_check
    _
  $region19: #{atten_pool_forward.4} parent=0 // pred_check_branch
    %22 = sbr.rel (0) target = $region21
  $region20: #{atten_pool_forward.4} parent=0 // pred_region
    _
  $region21: #{atten_pool_forward.4} parent=0 // pred_fallthru
    _
  // Predicated region
  $region22: #{atten_pool_forward.4} parent=0 // pred_check
    _
  $region23: #{atten_pool_forward.4} parent=0 // pred_check_branch
    %24 = sbr.rel (0) target = $region25
  $region24: #{atten_pool_forward.4} parent=0 // pred_region
    _
  $region25: #{atten_pool_forward.4} parent=0 // pred_fallthru
    _
  %v25 = vld [vmem:[%s0] sm:$0xff]
  %v26 = vld [vmem:[%s0 + $0x8] sm:$0xff]
  %v27 = vld [vmem:[%s0 + $0x10] sm:$0xff]
  %v28 = vld [vmem:[%s0 + $0x18] sm:$0xff]
  %v29 = vld [vmem:[%s0 + $0x20] sm:$0xff]
  %v30 = vld [vmem:[%s0 + $0x28] sm:$0xff]
  %v31 = vld [vmem:[%s0 + $0x30] sm:$0xff]
  %v32 = vld [vmem:[%s0 + $0x38] sm:$0xff]
  %v33 = vld [vmem:[%s2] sm:$0xf]
  %v35 = vperm.slane %v33, 0
  %v36 = vperm.slane %v33, 1
  %v37 = vperm.slane %v33, 2
  %v38 = vperm.slane %v33, 3
  %v43 = vmul.f32 %v25, %v35
  %v44 = vmul.f32 %v26, %v36
  %v45 = vmul.f32 %v27, %v37
  %v46 = vmul.f32 %v28, %v38
  %v47 = vmul.f32 %v29, %v35
  %v48 = vmul.f32 %v30, %v36
  %v49 = vmul.f32 %v31, %v37
  %v50 = vmul.f32 %v32, %v38
  %v51 = vld [vmem:[%s3] sm:$0xf]
  %v53 = vperm.slane %v51, 0
  %v54 = vperm.slane %v51, 1
  %v55 = vperm.slane %v51, 2
  %v56 = vperm.slane %v51, 3
  %v61 = vadd.f32 %v43, %v53
  %v62 = vadd.f32 %v44, %v54
  %v63 = vadd.f32 %v45, %v55
  %v64 = vadd.f32 %v46, %v56
  %v65 = vadd.f32 %v47, %v53
  %v66 = vadd.f32 %v48, %v54
  %v67 = vadd.f32 %v49, %v55
  %v68 = vadd.f32 %v50, %v56
  %v69 = vmax.f32 %v61, 0.0
  %v70 = vmax.f32 %v62, 0.0
  %v71 = vmax.f32 %v63, 0.0
  %v72 = vmax.f32 %v64, 0.0
  %v73 = vmax.f32 %v65, 0.0
  %v74 = vmax.f32 %v66, 0.0
  %v75 = vmax.f32 %v67, 0.0
  %v76 = vmax.f32 %v68, 0.0
  %v77 = vpack.c.bf16 %v73, %v69
  %v78 = vpack.c.bf16 %v74, %v70
  %v79 = vpack.c.bf16 %v75, %v71
  %v80 = vpack.c.bf16 %v76, %v72
  %v81 = vld [vmem:[%s4] sm:$0xf]
  %v82 = vld [vmem:[%s4 + $0x4] sm:$0xf]
  %v83 = vld [vmem:[%s4 + $0x8] sm:$0xf]
  %v84 = vld [vmem:[%s4 + $0xc] sm:$0xf]
  %v85 = vld [vmem:[%s4 + $0x10] sm:$0xf]
  %v86 = vld [vmem:[%s4 + $0x14] sm:$0xf]
  %v87 = vld [vmem:[%s4 + $0x18] sm:$0xf]
  %v88 = vld [vmem:[%s4 + $0x1c] sm:$0xf]
  %v89 = vld [vmem:[%s4 + $0x20] sm:$0xf]
  %v90 = vld [vmem:[%s4 + $0x24] sm:$0xf]
  %v91 = vld [vmem:[%s4 + $0x28] sm:$0xf]
  %v92 = vld [vmem:[%s4 + $0x2c] sm:$0xf]
  %v93 = vld [vmem:[%s4 + $0x30] sm:$0xf]
  %v94 = vld [vmem:[%s4 + $0x34] sm:$0xf]
  %v95 = vld [vmem:[%s4 + $0x38] sm:$0xf]
  %v96 = vld [vmem:[%s4 + $0x3c] sm:$0xf]
  %v97 = vld [vmem:[%s4 + $0x40] sm:$0xf]
  %v98 = vld [vmem:[%s4 + $0x44] sm:$0xf]
  %v99 = vld [vmem:[%s4 + $0x48] sm:$0xf]
  %v100 = vld [vmem:[%s4 + $0x4c] sm:$0xf]
  %v101 = vld [vmem:[%s4 + $0x50] sm:$0xf]
  %v102 = vld [vmem:[%s4 + $0x54] sm:$0xf]
  %v103 = vld [vmem:[%s4 + $0x58] sm:$0xf]
  %v104 = vld [vmem:[%s4 + $0x5c] sm:$0xf]
  %v105 = vld [vmem:[%s4 + $0x60] sm:$0xf]
  %v106 = vld [vmem:[%s4 + $0x64] sm:$0xf]
  %v107 = vld [vmem:[%s4 + $0x68] sm:$0xf]
  %v108 = vld [vmem:[%s4 + $0x6c] sm:$0xf]
  %v109 = vld [vmem:[%s4 + $0x70] sm:$0xf]
  %v110 = vld [vmem:[%s4 + $0x74] sm:$0xf]
  %v111 = vld [vmem:[%s4 + $0x78] sm:$0xf]
  %v112 = vld [vmem:[%s4 + $0x7c] sm:$0xf]
  %v113 = vld [vmem:[%s4 + $0x80] sm:$0xf]
  %v114 = vld [vmem:[%s4 + $0x84] sm:$0xf]
  %v115 = vld [vmem:[%s4 + $0x88] sm:$0xf]
  %v116 = vld [vmem:[%s4 + $0x8c] sm:$0xf]
  %v117 = vld [vmem:[%s4 + $0x90] sm:$0xf]
  %v118 = vld [vmem:[%s4 + $0x94] sm:$0xf]
  %v119 = vld [vmem:[%s4 + $0x98] sm:$0xf]
  %v120 = vld [vmem:[%s4 + $0x9c] sm:$0xf]
  %v121 = vld [vmem:[%s4 + $0xa0] sm:$0xf]
  %v122 = vld [vmem:[%s4 + $0xa4] sm:$0xf]
  %v123 = vld [vmem:[%s4 + $0xa8] sm:$0xf]
  %v124 = vld [vmem:[%s4 + $0xac] sm:$0xf]
  %v125 = vld [vmem:[%s4 + $0xb0] sm:$0xf]
  %v126 = vld [vmem:[%s4 + $0xb4] sm:$0xf]
  %v127 = vld [vmem:[%s4 + $0xb8] sm:$0xf]
  %v128 = vld [vmem:[%s4 + $0xbc] sm:$0xf]
  %v129 = vld [vmem:[%s4 + $0xc0] sm:$0xf]
  %v130 = vld [vmem:[%s4 + $0xc4] sm:$0xf]
  %v131 = vld [vmem:[%s4 + $0xc8] sm:$0xf]
  %v132 = vld [vmem:[%s4 + $0xcc] sm:$0xf]
  %v133 = vld [vmem:[%s4 + $0xd0] sm:$0xf]
  %v134 = vld [vmem:[%s4 + $0xd4] sm:$0xf]
  %v135 = vld [vmem:[%s4 + $0xd8] sm:$0xf]
  %v136 = vld [vmem:[%s4 + $0xdc] sm:$0xf]
  %v137 = vld [vmem:[%s4 + $0xe0] sm:$0xf]
  %v138 = vld [vmem:[%s4 + $0xe4] sm:$0xf]
  %v139 = vld [vmem:[%s4 + $0xe8] sm:$0xf]
  %v140 = vld [vmem:[%s4 + $0xec] sm:$0xf]
  %v141 = vld [vmem:[%s4 + $0xf0] sm:$0xf]
  %v142 = vld [vmem:[%s4 + $0xf4] sm:$0xf]
  %v143 = vld [vmem:[%s4 + $0xf8] sm:$0xf]
  %v144 = vld [vmem:[%s4 + $0xfc] sm:$0xf]
  %v145 = vld [vmem:[%s5] sm:$0x1]
  %v147 = vperm.slane %v145, 0
  %v213 = vunpack.c.l.b16 %v81
  %v214 = vunpack.c.l.b16 %v82
  %v215 = vunpack.c.l.b16 %v83
  %v216 = vunpack.c.l.b16 %v84
  %v217 = vunpack.c.l.b16 %v85
  %v218 = vunpack.c.l.b16 %v86
  %v219 = vunpack.c.l.b16 %v87
  %v220 = vunpack.c.l.b16 %v88
  %v221 = vunpack.c.l.b16 %v89
  %v222 = vunpack.c.l.b16 %v90
  %v223 = vunpack.c.l.b16 %v91
  %v224 = vunpack.c.l.b16 %v92
  %v225 = vunpack.c.l.b16 %v93
  %v226 = vunpack.c.l.b16 %v94
  %v227 = vunpack.c.l.b16 %v95
  %v228 = vunpack.c.l.b16 %v96
  %v229 = vunpack.c.l.b16 %v97
  %v230 = vunpack.c.l.b16 %v98
  %v231 = vunpack.c.l.b16 %v99
  %v232 = vunpack.c.l.b16 %v100
  %v233 = vunpack.c.l.b16 %v101
  %v234 = vunpack.c.l.b16 %v102
  %v235 = vunpack.c.l.b16 %v103
  %v236 = vunpack.c.l.b16 %v104
  %v237 = vunpack.c.l.b16 %v105
  %v238 = vunpack.c.l.b16 %v106
  %v239 = vunpack.c.l.b16 %v107
  %v240 = vunpack.c.l.b16 %v108
  %v241 = vunpack.c.l.b16 %v109
  %v242 = vunpack.c.l.b16 %v110
  %v243 = vunpack.c.l.b16 %v111
  %v244 = vunpack.c.l.b16 %v112
  %v245 = vunpack.c.l.b16 %v113
  %v246 = vunpack.c.l.b16 %v114
  %v247 = vunpack.c.l.b16 %v115
  %v248 = vunpack.c.l.b16 %v116
  %v249 = vunpack.c.l.b16 %v117
  %v250 = vunpack.c.l.b16 %v118
  %v251 = vunpack.c.l.b16 %v119
  %v252 = vunpack.c.l.b16 %v120
  %v253 = vunpack.c.l.b16 %v121
  %v254 = vunpack.c.l.b16 %v122
  %v255 = vunpack.c.l.b16 %v123
  %v256 = vunpack.c.l.b16 %v124
  %v257 = vunpack.c.l.b16 %v125
  %v258 = vunpack.c.l.b16 %v126
  %v259 = vunpack.c.l.b16 %v127
  %v260 = vunpack.c.l.b16 %v128
  %v261 = vunpack.c.l.b16 %v129
  %v262 = vunpack.c.l.b16 %v130
  %v263 = vunpack.c.l.b16 %v131
  %v264 = vunpack.c.l.b16 %v132
  %v265 = vunpack.c.l.b16 %v133
  %v266 = vunpack.c.l.b16 %v134
  %v267 = vunpack.c.l.b16 %v135
  %v268 = vunpack.c.l.b16 %v136
  %v269 = vunpack.c.l.b16 %v137
  %v270 = vunpack.c.l.b16 %v138
  %v271 = vunpack.c.l.b16 %v139
  %v272 = vunpack.c.l.b16 %v140
  %v273 = vunpack.c.l.b16 %v141
  %v274 = vunpack.c.l.b16 %v142
  %v275 = vunpack.c.l.b16 %v143
  %v276 = vunpack.c.l.b16 %v144
  %v277 = vpack.c.b16 %v214, %v213
  %v278 = vpack.c.b16 %v216, %v215
  %v279 = vpack.c.b16 %v218, %v217
  %v280 = vpack.c.b16 %v220, %v219
  %v281 = vpack.c.b16 %v222, %v221
  %v282 = vpack.c.b16 %v224, %v223
  %v283 = vpack.c.b16 %v226, %v225
  %v284 = vpack.c.b16 %v228, %v227
  %v285 = vpack.c.b16 %v230, %v229
  %v286 = vpack.c.b16 %v232, %v231
  %v287 = vpack.c.b16 %v234, %v233
  %v288 = vpack.c.b16 %v236, %v235
  %v289 = vpack.c.b16 %v238, %v237
  %v290 = vpack.c.b16 %v240, %v239
  %v291 = vpack.c.b16 %v242, %v241
  %v292 = vpack.c.b16 %v244, %v243
  %v293 = vpack.c.b16 %v246, %v245
  %v294 = vpack.c.b16 %v248, %v247
  %v295 = vpack.c.b16 %v250, %v249
  %v296 = vpack.c.b16 %v252, %v251
  %v297 = vpack.c.b16 %v254, %v253
  %v298 = vpack.c.b16 %v256, %v255
  %v299 = vpack.c.b16 %v258, %v257
  %v300 = vpack.c.b16 %v260, %v259
  %v301 = vpack.c.b16 %v262, %v261
  %v302 = vpack.c.b16 %v264, %v263
  %v303 = vpack.c.b16 %v266, %v265
  %v304 = vpack.c.b16 %v268, %v267
  %v305 = vpack.c.b16 %v270, %v269
  %v306 = vpack.c.b16 %v272, %v271
  %v307 = vpack.c.b16 %v274, %v273
  %v308 = vpack.c.b16 %v276, %v275
  %341 = vmatpush.bf16.msra.mxu0 %v284
  %342 = vmatpush.bf16.msra.mxu0 %v283
  %343 = vmatpush.bf16.msra.mxu0 %v282
  %344 = vmatpush.bf16.msra.mxu0 %v281
  %345 = vmatpush.bf16.msra.mxu0 %v280
  %346 = vmatpush.bf16.msra.mxu0 %v279
  %347 = vmatpush.bf16.msra.mxu0 %v278
  %348 = vmatpush.bf16.msra.mxu0 %v277
  %349 = vmatmul.bf16.gmra.mxu0 %v77
  %v350 = vpop.f32.mrf.mxu0
  %v351 = vadd.f32 %v147, %v350
  %v352 = vpop.f32.mrf.mxu0
  %v353 = vadd.f32 %v147, %v352
  %354 = vdwg.mxu0
  %355 = vmatpush.bf16.msra.mxu0 %v292
  %356 = vmatpush.bf16.msra.mxu0 %v291
  %357 = vmatpush.bf16.msra.mxu0 %v290
  %358 = vmatpush.bf16.msra.mxu0 %v289
  %359 = vmatpush.bf16.msra.mxu0 %v288
  %360 = vmatpush.bf16.msra.mxu0 %v287
  %361 = vmatpush.bf16.msra.mxu0 %v286
  %362 = vmatpush.bf16.msra.mxu0 %v285
  %363 = vmatmul.bf16.gmra.mxu0 %v78
  %v364 = vpop.f32.mrf.mxu0
  %v365 = vadd.f32 %v351, %v364
  %v366 = vpop.f32.mrf.mxu0
  %v367 = vadd.f32 %v353, %v366
  %368 = vdwg.mxu0
  %369 = vmatpush.bf16.msra.mxu0 %v300
  %370 = vmatpush.bf16.msra.mxu0 %v299
  %371 = vmatpush.bf16.msra.mxu0 %v298
  %372 = vmatpush.bf16.msra.mxu0 %v297
  %373 = vmatpush.bf16.msra.mxu0 %v296
  %374 = vmatpush.bf16.msra.mxu0 %v295
  %375 = vmatpush.bf16.msra.mxu0 %v294
  %376 = vmatpush.bf16.msra.mxu0 %v293
  %377 = vmatmul.bf16.gmra.mxu0 %v79
  %v378 = vpop.f32.mrf.mxu0
  %v379 = vadd.f32 %v365, %v378
  %v380 = vpop.f32.mrf.mxu0
  %v381 = vadd.f32 %v367, %v380
  %382 = vdwg.mxu0
  %383 = vmatpush.bf16.msra.mxu0 %v308
  %384 = vmatpush.bf16.msra.mxu0 %v307
  %385 = vmatpush.bf16.msra.mxu0 %v306
  %386 = vmatpush.bf16.msra.mxu0 %v305
  %387 = vmatpush.bf16.msra.mxu0 %v304
  %388 = vmatpush.bf16.msra.mxu0 %v303
  %389 = vmatpush.bf16.msra.mxu0 %v302
  %390 = vmatpush.bf16.msra.mxu0 %v301
  %391 = vmatmul.bf16.gmra.mxu0 %v80
  %v392 = vpop.f32.mrf.mxu0
  %v393 = vadd.f32 %v379, %v392
  %v394 = vpop.f32.mrf.mxu0
  %v395 = vadd.f32 %v381, %v394
  %396 = vdwg.mxu0
  %vm397 = vcmask 261120
  %398 = vst.msk [vmem:[%s6] sm:$0xff] %vm397, %v393
  %399 = vst.msk [vmem:[%s6 + $0x8] sm:$0xff] %vm397, %v395
  %v400 = vld [vmem:[%s1] sm:$0xff]
  %v401 = vld [vmem:[%s1 + $0x8] sm:$0xff]
  %403 = vset.pattern.permute.xlu0 0
  %404 = vperm.xlu0 %403, %v400
  %v405 = vpop.permute.xlu0 %404
  %408 = vset.pattern.permute.xlu0 0
  %409 = vperm.xlu0 %408, %v401
  %v410 = vpop.permute.xlu0 %409
  %v412 = vmul.f32 %v393, %v405
  %v413 = vmul.f32 %v395, %v410
  %414 = vst.msk [vmem:[%s7] sm:$0xff] %vm397, 0.0
  %v415 = vsel %vm397, %v412, 0.0
  %v416 = vsel %vm397, %v413, 0.0
  %v417 = vadd.f32 %v415, %v416
  %v418 = vrot.slane %v417, 4
  %v419 = vadd.f32 %v417, %v418
  %v420 = vrot.slane %v419, 2
  %v421 = vadd.f32 %v419, %v420
  %v422 = vrot.slane %v421, 1
  %v423 = vadd.f32 %v421, %v422
  %vm424 = vcmask 253952
  %425 = vst.msk [vmem:[%s7] sm:$0x1] %vm424, %v423
  %v426 = vmul.f32 %v412, %v393
  %v427 = vmul.f32 %v413, %v395
  %v428 = vsel %vm397, %v426, 0.0
  %v429 = vsel %vm397, %v427, 0.0
  %v430 = vadd.f32 %v428, %v429
  %v431 = vrot.slane %v430, 4
  %v432 = vadd.f32 %v430, %v431
  %v433 = vrot.slane %v432, 2
  %v434 = vadd.f32 %v432, %v433
  %v435 = vrot.slane %v434, 1
  %v436 = vadd.f32 %v434, %v435
  %437 = vst.msk [vmem:[%s7 + $0x1] sm:$0x1] %vm424, %v436
  // Predicated region
  $region26: #{atten_pool_forward.4} parent=0 // pred_check
    _
  $region27: #{atten_pool_forward.4} parent=0 // pred_check_branch
    %439 = sbr.rel (0) target = $region29
  $region28: #{atten_pool_forward.4} parent=0 // pred_region
    _
  $region29: #{atten_pool_forward.4} parent=0 // pred_fallthru
    _
  // Predicated region
  $region30: #{atten_pool_forward.4} parent=0 // pred_check
    _
  $region31: #{atten_pool_forward.4} parent=0 // pred_check_branch
    %441 = sbr.rel (0) target = $region33
  $region32: #{atten_pool_forward.4} parent=0 // pred_region
    _
  $region33: #{atten_pool_forward.4} parent=0 // pred_fallthru
    _
  // Predicated region
  $region34: #{atten_pool_forward.4} parent=0 // pred_check
    _
  $region35: #{atten_pool_forward.4} parent=0 // pred_check_branch
    %443 = sbr.rel (0) target = $region37
  $region36: #{atten_pool_forward.4} parent=0 // pred_region
    _
  $region37: #{atten_pool_forward.4} parent=0 // pred_fallthru
    _
  // Predicated region
  $region38: #{atten_pool_forward.4} parent=0 // pred_check
    _
  $region39: #{atten_pool_forward.4} parent=0 // pred_check_branch
    %445 = sbr.rel (0) target = $region41
  $region40: #{atten_pool_forward.4} parent=0 // pred_region
    _
  $region41: #{atten_pool_forward.4} parent=0 // pred_fallthru
    _

</llo_original>
